<compile_context>
chip_gen: v5e
topology: v5e:2x2
jax: 0.10.0
libtpu: 0.0.40
codegen_flags: <defaults>
</compile_context>

<pallas_src>
import functools
from typing import NamedTuple

import jax
import jax.numpy as jnp
from jax.experimental import pallas as pl
from jax.experimental.pallas import tpu as pltpu

_LANE = 128     # lane width of a vreg
_SUBLANE = 8    # sublane count of a vreg (f32)


def _round_up(x, m):
    return ((x + m - 1) // m) * m


def _cdiv(a, b):
    return (a + b - 1) // b


@functools.lru_cache(maxsize=None)
def _vmem_capacity_bytes():
    try:
        return int(pltpu.get_tpu_info().vmem_capacity_bytes)
    except Exception:
        return 64 << 20   # conservative fallback (v7x per-TensorCore VMEM)


class _Plan(NamedTuple):
    tm: int                    # batch tile rows
    g_b: int                   # grid steps over batch
    tn: int                    # label tile cols
    g_n: int                   # grid steps over (padded) labels
    b_tot: int                 # padded batch actually fed to the kernel
    vmem_limit: int
    single_buffer_params: bool  # weight/bias single-buffered (grid-invariant)


@functools.lru_cache(maxsize=None)
def _plan(B, F, n_pad):
    cap = _vmem_capacity_bytes()
    usable = (cap * 3) // 4                       # leave headroom for Mosaic

    b_pad = _round_up(B, _SUBLANE)

    # ---- label (N) tiling: keep the weight resident if it fits ~1/3 of VMEM ----
    w_budget = usable // 3
    units = n_pad // _LANE
    max_units = max(1, w_budget // (4 * F * _LANE))
    if units <= max_units:
        tn_units = units
    else:
        tn_units = 1
        for d in range(min(max_units, units), 0, -1):   # largest divisor of units
            if units % d == 0:
                tn_units = d
                break
    tn = tn_units * _LANE
    g_n = units // tn_units
    single_buffer_params = (g_n == 1)
    w_bufs = 1 if single_buffer_params else 2

    # ---- batch (M) tile from a byte budget (memory-bound kernel) ----
    row_bytes = 4 * (F + tn)                      # one x row + one out row (f32)
    target_tile_bytes = 4 << 20                   # ~4 MiB x+out tile per grid step
    tm = max(512, target_tile_bytes // row_bytes)
    param_bytes = w_bufs * 4 * tn * (F + 1)       # resident weight (+bias)
    tm_cap = max(_SUBLANE, (usable - param_bytes) // (2 * row_bytes))
    tm = min(tm, tm_cap, b_pad)
    tm = _round_up(tm, _SUBLANE)

    g_b = _cdiv(b_pad, tm)
    if g_b == 1 and b_pad >= 2 * _SUBLANE and b_pad % (2 * _SUBLANE) == 0:
        g_b = 2                                   # give both v7x TensorCores a tile
    tm = _round_up(_cdiv(b_pad, g_b), _SUBLANE)   # minimal-pad tiling of b_pad
    b_tot = tm * g_b

    footprint = 4 * (2 * tm * F + w_bufs * tn * F + w_bufs * tn + 2 * tm * tn)
    vmem_limit = int(min((cap * 4) // 5, max(footprint + (2 << 20), 8 << 20)))

    return _Plan(tm, g_b, tn, g_n, b_tot, vmem_limit, single_buffer_params)


def _linear_kernel(x_ref, w_ref, b_ref, o_ref):
    # x_ref: (TM, F), w_ref: (F, TN), b_ref: (1, TN) -> o_ref: (TM, TN)
    acc = jnp.dot(x_ref[...], w_ref[...], preferred_element_type=jnp.float32)
    o_ref[...] = (acc + b_ref[...]).astype(o_ref.dtype)


def prepare_lg_params(weight, bias):
    """One-time parameter prep (outside the hot forward).

    weight: (nlabel, feature_size)  PyTorch layout
    bias:   (nlabel,)
    returns w_t: (feature_size, n_pad) lane-dense, b2d: (1, n_pad)
    """
    nlabel, F = weight.shape
    n_pad = _round_up(max(nlabel, _LANE), _LANE)
    w_t = weight.T                                   # (F, nlabel), transposed once
    if n_pad != nlabel:
        w_t = jnp.pad(w_t, ((0, 0), (0, n_pad - nlabel)))
        bias = jnp.pad(bias, (0, n_pad - nlabel))
    return w_t, bias.reshape(1, n_pad)


@functools.partial(jax.jit, static_argnames=("nlabel",))
def lg_classifier_forward(x, w_t, b2d, nlabel):
    """Pallas implementation of LGclassifier.forward (a single nn.Linear).

    x:   (B, feature_size)        float32
    w_t: (feature_size, n_pad)    from prepare_lg_params (transposed + padded)
    b2d: (1, n_pad)
    returns (B, nlabel)           float32
    """
    B, F = x.shape
    n_pad = w_t.shape[1]
    plan = _plan(B, F, n_pad)
    tm, g_b, tn, g_n, b_tot, vmem_limit, single_buf = plan

    x_p = x if b_tot == B else jnp.pad(x, ((0, b_tot - B), (0, 0)))

    # Grid-invariant params: single-buffer when there is a single label tile.
    param_mode = pl.Buffered(buffer_count=1) if single_buf else None

    cost = pl.CostEstimate(
        flops=2 * b_tot * F * n_pad,
        transcendentals=0,
        bytes_accessed=4 * (b_tot * F + n_pad * F + b_tot * n_pad + n_pad),
    )

    # TODO(synk): if feature_size grows into the many-thousands, add a K grid
    # axis with a VMEM f32 accumulator (pl.when init/flush) instead of loading
    # the full F per step.
    out = pl.pallas_call(
        _linear_kernel,
        out_shape=jax.ShapeDtypeStruct((b_tot, n_pad), x.dtype),
        grid=(g_n, g_b),   # labels outer, batch inner: weight fixed over inner loop
        in_specs=[
            pl.BlockSpec((tm, F), lambda j, i: (i, 0)),                 # x tile
            pl.BlockSpec((F, tn), lambda j, i: (0, j),
                         pipeline_mode=param_mode),                     # weight
            pl.BlockSpec((1, tn), lambda j, i: (0, j),
                         pipeline_mode=param_mode),                     # bias
        ],
        out_specs=pl.BlockSpec((tm, tn), lambda j, i: (i, j)),
        compiler_params=pltpu.CompilerParams(
            dimension_semantics=("parallel", "parallel"),
            vmem_limit_bytes=vmem_limit,
        ),
        cost_estimate=cost,
    )(x_p, w_t, b2d)

    return out[:B, :nlabel]


if __name__ == "__main__":
    # Small shapes consistent with the module: feature_size=32, nlabel=8, batch=8.
    batch, feature_size, nlabel = 8, 32, 8

    key = jax.random.PRNGKey(0)
    kx, kw, kb = jax.random.split(key, 3)

    x = jax.random.normal(kx, (batch, feature_size), dtype=jnp.float32)

    # kaiming_normal_-style weight init (fan_in = feature_size), matching
    # LGclassifier.initialize(); bias uses PyTorch's default uniform bound.
    std = (2.0 / feature_size) ** 0.5
    weight = std * jax.random.normal(kw, (nlabel, feature_size), dtype=jnp.float32)
    bound = 1.0 / (feature_size ** 0.5)
    bias = jax.random.uniform(
        kb, (nlabel,), dtype=jnp.float32, minval=-bound, maxval=bound
    )

    # One-time parameter prep (transpose + lane padding), then the hot forward.
    w_t, b2d = prepare_lg_params(weight, bias)
    out = lg_classifier_forward(x, w_t, b2d, nlabel)
    out = jax.block_until_ready(out)

    # Cross-check against plain-JAX reference of nn.Linear semantics.
    ref = x @ weight.T + bias
    assert out.shape == (batch, nlabel)
    assert jnp.allclose(out, ref, atol=1e-5, rtol=1e-5)

    print("KERNEL_OK")
</pallas_src>

<mosaic_0001>
module attributes {stable_mosaic.version = 11 : i64} {
  func.func @_linear_kernel(%arg0: i32, %arg1: i32, %arg2: memref<8x32xf32, #tpu.memory_space<vmem>>, %arg3: memref<32x128xf32, #tpu.memory_space<vmem>>, %arg4: memref<1x128xf32, #tpu.memory_space<vmem>>, %arg5: memref<8x128xf32, #tpu.memory_space<vmem>>) attributes {dimension_semantics = [#tpu.dimension_semantics<parallel>, #tpu.dimension_semantics<parallel>], iteration_bounds = array<i64: 1, 1>, scalar_prefetch = 0 : i64, scratch_operands = 0 : i64, tpu.core_type = #tpu.core_type<tc>, window_params = [{transform_indices = @transform_0, window_bounds = array<i64: 8, 32>}, {pipeline_mode = #tpu.pipeline_mode<synchronous>, transform_indices = @transform_1, window_bounds = array<i64: 32, 128>}, {pipeline_mode = #tpu.pipeline_mode<synchronous>, transform_indices = @transform_2, window_bounds = array<i64: 1, 128>}, {transform_indices = @transform_3, window_bounds = array<i64: 8, 128>}]} {
    %c0 = arith.constant 0 : index
    %c0_0 = arith.constant 0 : index
    %0 = vector.load %arg2[%c0, %c0_0] : memref<8x32xf32, #tpu.memory_space<vmem>>, vector<8x32xf32>
    %c0_1 = arith.constant 0 : index
    %c0_2 = arith.constant 0 : index
    %1 = vector.load %arg3[%c0_1, %c0_2] : memref<32x128xf32, #tpu.memory_space<vmem>>, vector<32x128xf32>
    %cst = arith.constant dense<0.000000e+00> : vector<8x128xf32>
    %2 = tpu.matmul %0, %1, %cst {dimension_numbers = #tpu.dot_dimension_numbers<[1], [0], [0], [1], [0, 0, 1, 1], [], []>} : vector<8x32xf32>, vector<32x128xf32>, vector<8x128xf32> -> vector<8x128xf32>
    %c0_3 = arith.constant 0 : index
    %c0_4 = arith.constant 0 : index
    %3 = vector.load %arg4[%c0_3, %c0_4] : memref<1x128xf32, #tpu.memory_space<vmem>>, vector<1x128xf32>
    %4 = vector.broadcast %3 : vector<1x128xf32> to vector<8x128xf32>
    %5 = arith.addf %2, %4 : vector<8x128xf32>
    %c0_5 = arith.constant 0 : index
    %c0_6 = arith.constant 0 : index
    %6 = vector.load %arg5[%c0_5, %c0_6] : memref<8x128xf32, #tpu.memory_space<vmem>>, vector<8x128xf32>
    tpu.vector_store %arg5[%c0_5, %c0_6], %5 {strides = array<i32>} : memref<8x128xf32, #tpu.memory_space<vmem>>, vector<8x128xf32>,
    return
  }
  func.func @transform_0(%arg0: i32, %arg1: i32) -> (i32, i32) {
    %c0_i32 = arith.constant 0 : i32
    %c0_i32_0 = arith.constant 0 : i32
    return %arg1, %c0_i32 : i32, i32
  }
  func.func @transform_1(%arg0: i32, %arg1: i32) -> (i32, i32) {
    %c0_i32 = arith.constant 0 : i32
    %c0_i32_0 = arith.constant 0 : i32
    return %c0_i32, %arg0 : i32, i32
  }
  func.func @transform_2(%arg0: i32, %arg1: i32) -> (i32, i32) {
    %c0_i32 = arith.constant 0 : i32
    %c0_i32_0 = arith.constant 0 : i32
    return %c0_i32, %arg0 : i32, i32
  }
  func.func @transform_3(%arg0: i32, %arg1: i32) -> (i32, i32) {
    %c0_i32 = arith.constant 0 : i32
    return %arg1, %arg0 : i32, i32
  }
}

</mosaic_0001>

<llo_original>
// kernel: lg_classifier_forward.1
$region0: #{lg_classifier_forward.1}
  #allocation0 [shape = 'u32[]', space=smem, size = 0x4, offset = 0x4, fixed_abs, tag = 'smem constant byte address 0x4 - core index']
  #allocation1 [shape = 'u32[72,128]{1,0:T(1,128)}', space=vmem, size = 0x9000, scoped, tag = 'internal scratch']
  %s0 = inlined_call_operand.hbm [shape: f32[8,32], index: 0, kind: input, shape index: {}]
  %s1 = inlined_call_operand.hbm [shape: f32[32,128], index: 1, kind: input, shape index: {}]
  %s2 = inlined_call_operand.vmem [shape: f32[1,128], index: 2, kind: input, shape index: {}]
  %s3 = inlined_call_operand.hbm [shape: f32[8,128], index: 3, kind: output, shape index: {}]
  %s4 = sld [smem:[#allocation0]]
  $region30: #{lg_classifier_forward.1} parent=0
    _
  %s6 = ssub.s32 1, %s4
  %s7 = scalar_select 0, %s6, %s4
  $region1: #{lg_classifier_forward.1} parent=0
    #allocation2 [shape = 'u8[4096]{0}', space=vmem, size = 0x1000, scoped, tag = 'input window, operand 0, single buffered']
    #allocation3 [shape = 's32[1]{0}', space=sflag, size = 0x4, scoped, tag = 'scoped memory for lg_classifier_forward.1']
    #allocation4 [shape = 's32[1]{0}', space=sflag, size = 0x4, scoped, tag = 'scoped memory for lg_classifier_forward.1']
    #allocation5 [shape = 'u8[16384]{0}', space=vmem, size = 0x4000, scoped, tag = 'input window, operand 1, single buffered']
    #allocation6 [shape = 's32[1]{0}', space=sflag, size = 0x4, scoped, tag = 'scoped memory for lg_classifier_forward.1']
    #allocation7 [shape = 'u8[4096]{0}', space=vmem, size = 0x1000, scoped, tag = 'output window, operand 0, single buffered']
    %8 = vsyncpa [#allocation3], 0
    %9 = vsyncpa [#allocation6], 0
    %10 = vsyncpa [#allocation4], 0
    // Predicated region
    $region2: #{lg_classifier_forward.1} parent=1 // pred_check
      _
    $region3: #{lg_classifier_forward.1} parent=1 // pred_check_branch
      %12 = sbr.rel (0) target = $region5
    $region4: #{lg_classifier_forward.1} parent=1 // pred_region
      %14 = vsyncadd [#allocation3], 0
      %s16 = sshll.u32 %s0, 4
      %s17 = int_to_ptr.hbm [resolvable:$true] %s16
      %s18 = sshll.u32 [#allocation2], 4
      %s19 = int_to_ptr.vmem [resolvable:$true] %s18
      %21 = dma.hbm_to_vmem [thread:$0]  %s17, 128, %s19, [#allocation3]
    $region5: #{lg_classifier_forward.1} parent=1 // pred_fallthru
      _
    // Predicated region
    $region6: #{lg_classifier_forward.1} parent=1 // pred_check
      _
    $region7: #{lg_classifier_forward.1} parent=1 // pred_check_branch
      %23 = sbr.rel (0) target = $region9
    $region8: #{lg_classifier_forward.1} parent=1 // pred_region
      %25 = vsyncadd [#allocation6], 0
      %s26 = sshll.u32 %s1, 4
      %s27 = int_to_ptr.hbm [resolvable:$true] %s26
      %s28 = sshll.u32 [#allocation5], 4
      %s29 = int_to_ptr.vmem [resolvable:$true] %s28
      %34 = dma.hbm_to_vmem [thread:$0]  %s27, 512, %s29, [#allocation6], 128, 128, 8
    $region9: #{lg_classifier_forward.1} parent=1 // pred_fallthru
      _
    // Predicated region
    $region10: #{lg_classifier_forward.1} parent=1 // pred_check
      _
    $region11: #{lg_classifier_forward.1} parent=1 // pred_check_branch
      %36 = sbr.rel (0) target = $region13
    $region12: #{lg_classifier_forward.1} parent=1 // pred_region
      _
    $region13: #{lg_classifier_forward.1} parent=1 // pred_fallthru
      _
    // Predicated region
    $region14: #{lg_classifier_forward.1} parent=1 // pred_check
      _
    $region15: #{lg_classifier_forward.1} parent=1 // pred_check_branch
      %38 = sbr.rel (0) target = $region17
    $region16: #{lg_classifier_forward.1} parent=1 // pred_region
      %40 = dma.done [#allocation3], 128
    $region17: #{lg_classifier_forward.1} parent=1 // pred_fallthru
      _
    // Predicated region
    $region18: #{lg_classifier_forward.1} parent=1 // pred_check
      _
    $region19: #{lg_classifier_forward.1} parent=1 // pred_check_branch
      %42 = sbr.rel (0) target = $region21
    $region20: #{lg_classifier_forward.1} parent=1 // pred_region
      %44 = dma.done [#allocation6], 512
    $region21: #{lg_classifier_forward.1} parent=1 // pred_fallthru
      _
    %v45 = vld [vmem:[#allocation2] sm:$0xff]
    %v46 = vld [vmem:[#allocation5] sm:$0xff]
    %v47 = vld [vmem:[#allocation5 + $0x8] sm:$0xff]
    %v48 = vld [vmem:[#allocation5 + $0x10] sm:$0xff]
    %v49 = vld [vmem:[#allocation5 + $0x18] sm:$0xff]
    %v50 = vld [vmem:[%s2] sm:$0x1]
    %v52 = vperm.slane %v50, 0
    %vm54 = vcmask 261120
    %v56 = vsel %vm54, %v45, 0
    %58 = vmatpush.msra.mxu0 0.0
    %59 = vmatpush.msra.mxu0 0.0
    %60 = vmatpush.msra.mxu0 0.0
    %61 = vmatpush.msra.mxu0 0.0
    %62 = vmatpush.msra.mxu0 0.0
    %63 = vmatpush.msra.mxu0 0.0
    %64 = vmatpush.msra.mxu0 0.0
    %65 = vmatpush.msra.mxu0 0.0
    %66 = vmatpush.msra.mxu0 0.0
    %67 = vmatpush.msra.mxu0 0.0
    %68 = vmatpush.msra.mxu0 0.0
    %69 = vmatpush.msra.mxu0 0.0
    %70 = vmatpush.msra.mxu0 %v49
    %71 = vmatpush.msra.mxu0 %v48
    %72 = vmatpush.msra.mxu0 %v47
    %73 = vmatpush.msra.mxu0 %v46
    %74 = vmatmul.f32.gmra.mxu0 %v56
    %v75 = vpop.f32.mrf.mxu0
    %v76 = vadd.f32 %v52, %v75
    %77 = vdwg.mxu0
    %78 = vst [vmem:[#allocation7] sm:$0xff] %v76
    // Predicated region
    $region22: #{lg_classifier_forward.1} parent=1 // pred_check
      _
    $region23: #{lg_classifier_forward.1} parent=1 // pred_check_branch
      %80 = sbr.rel (0) target = $region25
    $region24: #{lg_classifier_forward.1} parent=1 // pred_region
      %82 = vsyncadd [#allocation4], 0
      %s84 = sshll.u32 [#allocation7], 4
      %s85 = int_to_ptr.vmem [resolvable:$true] %s84
      %s86 = sshll.u32 %s3, 4
      %s87 = int_to_ptr.hbm [resolvable:$true] %s86
      %89 = dma.vmem_to_hbm [thread:$0]  %s85, 128, %s87, [#allocation4]
    $region25: #{lg_classifier_forward.1} parent=1 // pred_fallthru
      _
    // Predicated region
    $region26: #{lg_classifier_forward.1} parent=1 // pred_check
      _
    $region27: #{lg_classifier_forward.1} parent=1 // pred_check_branch
      %91 = sbr.rel (0) target = $region29
    $region28: #{lg_classifier_forward.1} parent=1 // pred_region
      %93 = dma.done [#allocation4], 128
    $region29: #{lg_classifier_forward.1} parent=1 // pred_fallthru
      _
    %94 = vsyncpa [#allocation3], 1
    %95 = vsyncpa [#allocation6], 1
    %96 = vsyncpa [#allocation4], 1

</llo_original>
